<compile_context>
chip_gen: v6e
topology: v6e:2x2x1
jax: 0.10.0
libtpu: 0.0.40
codegen_flags: <defaults>
</compile_context>

<pallas_src>
import jax
import jax.numpy as jnp
from jax.experimental import pallas as pl
from jax.experimental.pallas import tpu as pltpu

LANE = 128
SUBLANE = 8


def _round_up(x, m):
    return ((x + m - 1) // m) * m


def _cdiv(a, b):
    return -(-a // b)


# ---------------------------------------------------------------------------
# Fused kernel: out[i, j] = relu(x[i] @ w1 + b1) @ w2[:, j] + b2[j]
# grid = (row tiles, output-column tiles); hidden activations cached in scratch.
# ---------------------------------------------------------------------------
def mlp_kernel(x_ref, w1_ref, b1_ref, w2_ref, b2_ref, o_ref, h_ref):
    @pl.when(pl.program_id(1) == 0)
    def _():
        # fc1: bf16 MXU operands, f32 accumulate; bias + ReLU in f32 (v5e-safe),
        # then cast the reusable hidden activations to bf16 for the fc2 MXU.
        h = jnp.dot(x_ref[...], w1_ref[...], preferred_element_type=jnp.float32)
        h = h + b1_ref[...]
        h_ref[...] = jnp.maximum(h, 0.0).astype(jnp.bfloat16)

    # fc2 on this output-column tile; f32 store (lane-dense, unmasked).
    o_ref[...] = (
        jnp.dot(h_ref[...], w2_ref[...], preferred_element_type=jnp.float32)
        + b2_ref[...]
    )


def pad_params(w1, b1, w2, b2):
    """Pad + bf16-cast the weights ONCE (hoisted out of the per-call path).

    Zero padding keeps results exact: padded input columns hit zero rows of w1,
    padded hidden units have zero weight/bias (relu(0)=0) and zero rows of w2.
    """
    K, H = w1.shape
    H2, N = w2.shape
    assert H2 == H, "w1/w2 hidden dims must match"
    Kp, Hp, Np = _round_up(K, LANE), _round_up(H, LANE), _round_up(N, LANE)

    w1b = w1.astype(jnp.bfloat16)
    w2b = w2.astype(jnp.bfloat16)
    b1f = b1.astype(jnp.float32).reshape(1, H)
    b2f = b2.astype(jnp.float32).reshape(1, N)

    if (Kp, Hp) != (K, H):
        w1b = jnp.zeros((Kp, Hp), jnp.bfloat16).at[:K, :H].set(w1b)
    if Hp != H:
        b1f = jnp.zeros((1, Hp), jnp.float32).at[:, :H].set(b1f)
    if (Hp, Np) != (H, N):
        w2b = jnp.zeros((Hp, Np), jnp.bfloat16).at[:H, :N].set(w2b)
    if Np != N:
        b2f = jnp.zeros((1, Np), jnp.float32).at[:, :N].set(b2f)

    return (w1b, b1f, w2b, b2f), (K, H, N)


def mlp_forward(x, padded_params, dims, *, row_tile=512, col_tile=512):
    """x: (M, K) f32; padded_params from pad_params(); returns (M, N) f32."""
    w1p, b1p, w2p, b2p = padded_params
    K, H, N = dims
    M = x.shape[0]
    assert x.shape[1] == K
    Kp, Hp = w1p.shape
    Np = w2p.shape[1]

    # Row tiling: multiples of 8 sublanes; keep >= 2 row tiles when possible so
    # v7x's two TensorCores both get work on the "parallel" axis.
    row_tile = max(SUBLANE, _round_up(row_tile, SUBLANE))
    tm = min(row_tile, _round_up(M, SUBLANE))
    if _round_up(M, tm) // tm < 2 and tm > SUBLANE:
        tm = _round_up(_cdiv(M, 2), SUBLANE)
    Mp = _round_up(M, tm)

    # Output-column tiling: largest 128-multiple <= col_tile that divides Np.
    tn = min(max(LANE, _round_up(col_tile, LANE)), Np)
    while Np % tn:
        tn -= LANE

    # Input padded directly in bf16 (halves HBM->VMEM DMA for x); skip if aligned.
    if (Mp, Kp) == (M, K):
        xp = x.astype(jnp.bfloat16)
    else:
        xp = jnp.zeros((Mp, Kp), jnp.bfloat16).at[:M, :K].set(x.astype(jnp.bfloat16))

    # VMEM budget from actual buffer sizes (+30% headroom); stays small for small
    # shapes, capped at 112 MiB (v5e/v6e) — large shapes should shrink tiles on v7x.
    need = (
        2 * tm * Kp * 2      # x tile, double-buffered bf16
        + Kp * Hp * 2        # w1 resident, single-buffered bf16
        + Hp * 4             # b1, single-buffered f32
        + 2 * Hp * tn * 2    # w2 column tile, double-buffered bf16
        + 2 * tn * 4         # b2 column tile, double-buffered f32
        + 2 * tm * tn * 4    # out tile, double-buffered f32
        + tm * Hp * 2        # hidden-activation scratch, bf16
    )
    vmem_limit = min(max(int(need * 1.3) + (4 << 20), 32 << 20), 112 << 20)

    out = pl.pallas_call(
        mlp_kernel,
        out_shape=jax.ShapeDtypeStruct((Mp, Np), jnp.float32),
        grid_spec=pltpu.PrefetchScalarGridSpec(
            num_scalar_prefetch=0,
            grid=(Mp // tm, Np // tn),
            in_specs=[
                pl.BlockSpec((tm, Kp), lambda i, j: (i, 0)),          # x row tile
                pl.BlockSpec((Kp, Hp), lambda i, j: (0, 0),
                             pipeline_mode=pl.Buffered(1)),           # w1 (constant)
                pl.BlockSpec((1, Hp), lambda i, j: (0, 0),
                             pipeline_mode=pl.Buffered(1)),           # b1 (constant)
                pl.BlockSpec((Hp, tn), lambda i, j: (0, j)),          # w2 column tile
                pl.BlockSpec((1, tn), lambda i, j: (0, j)),           # b2 column tile
            ],
            out_specs=pl.BlockSpec((tm, tn), lambda i, j: (i, j)),
            scratch_shapes=[pltpu.VMEM((tm, Hp), jnp.bfloat16)],      # cached h
        ),
        compiler_params=pltpu.CompilerParams(
            dimension_semantics=("parallel", "arbitrary"),
            vmem_limit_bytes=vmem_limit,
        ),
    )(xp, w1p, b1p, w2p, b2p)

    if (Mp, Np) == (M, N):
        return out
    return out[:M, :N]


# -------------- pure-JAX reference (same bf16 MXU / f32-accumulate casts) -----
def mlp_ref(x, w1, b1, w2, b2):
    h = jnp.dot(x.astype(jnp.bfloat16), w1.astype(jnp.bfloat16),
                preferred_element_type=jnp.float32) + b1[None, :]
    h = jnp.maximum(h, 0.0)
    return jnp.dot(h.astype(jnp.bfloat16), w2.astype(jnp.bfloat16),
                   preferred_element_type=jnp.float32) + b2[None, :]


def init_linear(key, fan_in, fan_out):
    # nn.Linear default init: U(-1/sqrt(fan_in), 1/sqrt(fan_in)).
    bound = 1.0 / jnp.sqrt(jnp.float32(fan_in))
    kw, kb = jax.random.split(key)
    w = jax.random.uniform(kw, (fan_in, fan_out), jnp.float32, -bound, bound)
    b = jax.random.uniform(kb, (fan_out,), jnp.float32, -bound, bound)
    return w, b


if __name__ == "__main__":
    key = jax.random.PRNGKey(0)
    kx, k1, k2, k3 = jax.random.split(key, 4)

    # --- case 1: module-sized toy shapes (unaligned -> exercises padding path) ---
    BATCH, INPUT_DIM, HIDDEN_DIM, OUTPUT_DIM = 8, 32, 64, 16
    x = jax.random.normal(kx, (BATCH, INPUT_DIM), jnp.float32)
    w1, b1 = init_linear(k1, INPUT_DIM, HIDDEN_DIM)
    w2, b2 = init_linear(k2, HIDDEN_DIM, OUTPUT_DIM)

    padded, dims = pad_params(w1, b1, w2, b2)     # pad/cast weights once, reuse
    y = mlp_forward(x, padded, dims)
    jax.block_until_ready(y)
    y_ref = mlp_ref(x, w1, b1, w2, b2)
    assert y.shape == (BATCH, OUTPUT_DIM)
    assert bool(jnp.all(jnp.isfinite(y)))
    assert jnp.allclose(y, y_ref, rtol=2e-3, atol=2e-3), (
        f"case1 max abs diff {jnp.max(jnp.abs(y - y_ref))}")

    # --- case 2: multi-tile grid (rows AND output columns) ---
    M2, K2, H2, N2 = 272, 128, 256, 384
    ka, kb_, kc = jax.random.split(k3, 3)
    x2 = jax.random.normal(ka, (M2, K2), jnp.float32)
    w1b, b1b = init_linear(kb_, K2, H2)
    w2b, b2b = init_linear(kc, H2, N2)

    padded2, dims2 = pad_params(w1b, b1b, w2b, b2b)
    y2 = mlp_forward(x2, padded2, dims2, row_tile=128, col_tile=128)
    jax.block_until_ready(y2)
    y2_ref = mlp_ref(x2, w1b, b1b, w2b, b2b)
    assert y2.shape == (M2, N2)
    assert jnp.allclose(y2, y2_ref, rtol=1e-2, atol=1e-2), (
        f"case2 max abs diff {jnp.max(jnp.abs(y2 - y2_ref))}")

    print("KERNEL_OK")
</pallas_src>

<mosaic_0001>
module attributes {stable_mosaic.version = 11 : i64} {
  func.func @mlp_kernel(%arg0: i32, %arg1: i32, %arg2: memref<8x128xbf16, #tpu.memory_space<vmem>>, %arg3: memref<128x128xbf16, #tpu.memory_space<vmem>>, %arg4: memref<1x128xf32, #tpu.memory_space<vmem>>, %arg5: memref<128x128xbf16, #tpu.memory_space<vmem>>, %arg6: memref<1x128xf32, #tpu.memory_space<vmem>>, %arg7: memref<8x128xf32, #tpu.memory_space<vmem>>, %arg8: memref<8x128xbf16, #tpu.memory_space<vmem>>) attributes {dimension_semantics = [#tpu.dimension_semantics<parallel>, #tpu.dimension_semantics<arbitrary>], iteration_bounds = array<i64: 1, 1>, scalar_prefetch = 0 : i64, scratch_operands = 1 : i64, tpu.core_type = #tpu.core_type<tc>, window_params = [{transform_indices = @transform_0, window_bounds = array<i64: 8, 128>}, {pipeline_mode = #tpu.pipeline_mode<synchronous>, transform_indices = @transform_1, window_bounds = array<i64: 128, 128>}, {pipeline_mode = #tpu.pipeline_mode<synchronous>, transform_indices = @transform_2, window_bounds = array<i64: 1, 128>}, {transform_indices = @transform_3, window_bounds = array<i64: 128, 128>}, {transform_indices = @transform_4, window_bounds = array<i64: 1, 128>}, {transform_indices = @transform_5, window_bounds = array<i64: 8, 128>}]} {
    %c0_i32 = arith.constant 0 : i32
    %0 = arith.cmpi eq, %arg1, %c0_i32 : i32
    %1 = arith.extui %0 : i1 to i32
    %c0_i32_0 = arith.constant 0 : i32
    %2 = arith.cmpi ne, %1, %c0_i32_0 : i32
    scf.if %2 {
      %c0_8 = arith.constant 0 : index
      %c0_9 = arith.constant 0 : index
      %10 = vector.load %arg2[%c0_8, %c0_9] : memref<8x128xbf16, #tpu.memory_space<vmem>>, vector<8x128xbf16>
      %c0_10 = arith.constant 0 : index
      %c0_11 = arith.constant 0 : index
      %11 = vector.load %arg3[%c0_10, %c0_11] : memref<128x128xbf16, #tpu.memory_space<vmem>>, vector<128x128xbf16>
      %cst_12 = arith.constant dense<0.000000e+00> : vector<8x128xf32>
      %12 = tpu.matmul %10, %11, %cst_12 {dimension_numbers = #tpu.dot_dimension_numbers<[1], [0], [0], [1], [0, 0, 1, 1], [], []>} : vector<8x128xbf16>, vector<128x128xbf16>, vector<8x128xf32> -> vector<8x128xf32>
      %c0_13 = arith.constant 0 : index
      %c0_14 = arith.constant 0 : index
      %13 = vector.load %arg4[%c0_13, %c0_14] : memref<1x128xf32, #tpu.memory_space<vmem>>, vector<1x128xf32>
      %14 = vector.broadcast %13 : vector<1x128xf32> to vector<8x128xf32>
      %15 = arith.addf %12, %14 : vector<8x128xf32>
      %cst_15 = arith.constant 0.000000e+00 : f32
      %16 = vector.broadcast %cst_15 : f32 to vector<8x128xf32>
      %17 = arith.maximumf %15, %16 : vector<8x128xf32>
      %18 = arith.truncf %17 : vector<8x128xf32> to vector<8x128xbf16>
      %c0_16 = arith.constant 0 : index
      %c0_17 = arith.constant 0 : index
      %19 = vector.load %arg8[%c0_16, %c0_17] : memref<8x128xbf16, #tpu.memory_space<vmem>>, vector<8x128xbf16>
      tpu.vector_store %arg8[%c0_16, %c0_17], %18 {strides = array<i32>} : memref<8x128xbf16, #tpu.memory_space<vmem>>, vector<8x128xbf16>,
    } else {
    }
    %c0 = arith.constant 0 : index
    %c0_1 = arith.constant 0 : index
    %3 = vector.load %arg8[%c0, %c0_1] : memref<8x128xbf16, #tpu.memory_space<vmem>>, vector<8x128xbf16>
    %c0_2 = arith.constant 0 : index
    %c0_3 = arith.constant 0 : index
    %4 = vector.load %arg5[%c0_2, %c0_3] : memref<128x128xbf16, #tpu.memory_space<vmem>>, vector<128x128xbf16>
    %cst = arith.constant dense<0.000000e+00> : vector<8x128xf32>
    %5 = tpu.matmul %3, %4, %cst {dimension_numbers = #tpu.dot_dimension_numbers<[1], [0], [0], [1], [0, 0, 1, 1], [], []>} : vector<8x128xbf16>, vector<128x128xbf16>, vector<8x128xf32> -> vector<8x128xf32>
    %c0_4 = arith.constant 0 : index
    %c0_5 = arith.constant 0 : index
    %6 = vector.load %arg6[%c0_4, %c0_5] : memref<1x128xf32, #tpu.memory_space<vmem>>, vector<1x128xf32>
    %7 = vector.broadcast %6 : vector<1x128xf32> to vector<8x128xf32>
    %8 = arith.addf %5, %7 : vector<8x128xf32>
    %c0_6 = arith.constant 0 : index
    %c0_7 = arith.constant 0 : index
    %9 = vector.load %arg7[%c0_6, %c0_7] : memref<8x128xf32, #tpu.memory_space<vmem>>, vector<8x128xf32>
    tpu.vector_store %arg7[%c0_6, %c0_7], %8 {strides = array<i32>} : memref<8x128xf32, #tpu.memory_space<vmem>>, vector<8x128xf32>,
    return
  }
  func.func @transform_0(%arg0: i32, %arg1: i32) -> (i32, i32) {
    %c0_i32 = arith.constant 0 : i32
    %c0_i32_0 = arith.constant 0 : i32
    return %arg0, %c0_i32 : i32, i32
  }
  func.func @transform_1(%arg0: i32, %arg1: i32) -> (i32, i32) {
    %c0_i32 = arith.constant 0 : i32
    %c0_i32_0 = arith.constant 0 : i32
    %c0_i32_1 = arith.constant 0 : i32
    return %c0_i32, %c0_i32_0 : i32, i32
  }
  func.func @transform_2(%arg0: i32, %arg1: i32) -> (i32, i32) {
    %c0_i32 = arith.constant 0 : i32
    %c0_i32_0 = arith.constant 0 : i32
    %c0_i32_1 = arith.constant 0 : i32
    return %c0_i32, %c0_i32_0 : i32, i32
  }
  func.func @transform_3(%arg0: i32, %arg1: i32) -> (i32, i32) {
    %c0_i32 = arith.constant 0 : i32
    %c0_i32_0 = arith.constant 0 : i32
    return %c0_i32, %arg1 : i32, i32
  }
  func.func @transform_4(%arg0: i32, %arg1: i32) -> (i32, i32) {
    %c0_i32 = arith.constant 0 : i32
    %c0_i32_0 = arith.constant 0 : i32
    return %c0_i32, %arg1 : i32, i32
  }
  func.func @transform_5(%arg0: i32, %arg1: i32) -> (i32, i32) {
    %c0_i32 = arith.constant 0 : i32
    return %arg0, %arg1 : i32, i32
  }
}

</mosaic_0001>

<llo_original>
// kernel: tpu_custom_call.1
$region0: #{tpu_custom_call.1}
  #allocation0 [shape = 'u32[]', space=smem, size = 0x4, offset = 0x4, fixed_abs, tag = 'smem constant byte address 0x4 - core index']
  #allocation1 [shape = 'u32[144,128]{1,0:T(1,128)}', space=vmem, size = 0x12000, scoped, tag = 'internal scratch']
  #allocation2 [shape = 'bf16[8,128]{1,0:T(8,128)(2,1)}', space=vmem, size = 0x800, scoped, tag = 'scratch operand']
  %s0 = inlined_call_operand.hbm [shape: bf16[8,128], index: 0, kind: input, shape index: {}]
  %s1 = inlined_call_operand.hbm [shape: bf16[128,128], index: 1, kind: input, shape index: {}]
  %s2 = inlined_call_operand.vmem [shape: f32[1,128], index: 2, kind: input, shape index: {}]
  %s3 = inlined_call_operand.hbm [shape: bf16[128,128], index: 3, kind: input, shape index: {}]
  %s4 = inlined_call_operand.vmem [shape: f32[1,128], index: 4, kind: input, shape index: {}]
  %s5 = inlined_call_operand.hbm [shape: f32[8,128], index: 5, kind: output, shape index: {}]
  %s6 = sld [smem:[#allocation0]]
  $region46: #{tpu_custom_call.1} parent=0
    _
  %s8 = ssub.s32 1, %s6
  %s9 = scalar_select 0, %s8, %s6
  $region1: #{tpu_custom_call.1} parent=0
    #allocation3 [shape = 'u8[2048]{0}', space=vmem, size = 0x800, scoped, tag = 'input window, operand 0, single buffered']
    #allocation4 [shape = 's32[1]{0}', space=sflag, size = 0x4, scoped, tag = 'scoped memory for tpu_custom_call.1']
    #allocation5 [shape = 's32[1]{0}', space=sflag, size = 0x4, scoped, tag = 'scoped memory for tpu_custom_call.1']
    #allocation6 [shape = 'u8[32768]{0}', space=vmem, size = 0x8000, scoped, tag = 'input window, operand 1, single buffered']
    #allocation7 [shape = 's32[1]{0}', space=sflag, size = 0x4, scoped, tag = 'scoped memory for tpu_custom_call.1']
    #allocation8 [shape = 'u8[32768]{0}', space=vmem, size = 0x8000, scoped, tag = 'input window, operand 3, single buffered']
    #allocation9 [shape = 'u8[4096]{0}', space=vmem, size = 0x1000, scoped, tag = 'output window, operand 0, single buffered']
    %10 = vsyncpa [#allocation4], 0
    %11 = vsyncpa [#allocation7], 0
    %12 = vsyncpa [#allocation5], 0
    // Predicated region
    $region2: #{tpu_custom_call.1} parent=1 // pred_check
      _
    $region3: #{tpu_custom_call.1} parent=1 // pred_check_branch
      %14 = sbr.rel (0) target = $region5
    $region4: #{tpu_custom_call.1} parent=1 // pred_region
      %s16 = ssub.s32 64, 64
      %17 = vsyncadd [#allocation4], %s16
      %s19 = sshll.u32 [#allocation3], 4
      %s20 = int_to_ptr.vmem [resolvable:$true] %s19
      %22 = dma.hbm_to_vmem [thread:$0]  %s0, 64, %s20, [#allocation4]
    $region5: #{tpu_custom_call.1} parent=1 // pred_fallthru
      _
    // Predicated region
    $region6: #{tpu_custom_call.1} parent=1 // pred_check
      _
    $region7: #{tpu_custom_call.1} parent=1 // pred_check_branch
      %24 = sbr.rel (0) target = $region9
    $region8: #{tpu_custom_call.1} parent=1 // pred_region
      %s26 = ssub.s32 1024, 1024
      %27 = vsyncadd [#allocation7], %s26
      %s28 = sshll.u32 [#allocation6], 4
      %s29 = int_to_ptr.vmem [resolvable:$true] %s28
      %34 = dma.hbm_to_vmem [thread:$0]  %s1, 1024, %s29, [#allocation7], 64, 64, 4
    $region9: #{tpu_custom_call.1} parent=1 // pred_fallthru
      _
    // Predicated region
    $region10: #{tpu_custom_call.1} parent=1 // pred_check
      _
    $region11: #{tpu_custom_call.1} parent=1 // pred_check_branch
      %36 = sbr.rel (0) target = $region13
    $region12: #{tpu_custom_call.1} parent=1 // pred_region
      _
    $region13: #{tpu_custom_call.1} parent=1 // pred_fallthru
      _
    // Predicated region
    $region14: #{tpu_custom_call.1} parent=1 // pred_check
      _
    $region15: #{tpu_custom_call.1} parent=1 // pred_check_branch
      %38 = sbr.rel (0) target = $region17
    $region16: #{tpu_custom_call.1} parent=1 // pred_region
      %s40 = ssub.s32 1024, 1024
      %41 = vsyncadd [#allocation7], %s40
      %s42 = sshll.u32 [#allocation8], 4
      %s43 = int_to_ptr.vmem [resolvable:$true] %s42
      %48 = dma.hbm_to_vmem [thread:$0]  %s3, 1024, %s43, [#allocation7], 64, 64, 4
    $region17: #{tpu_custom_call.1} parent=1 // pred_fallthru
      _
    // Predicated region
    $region18: #{tpu_custom_call.1} parent=1 // pred_check
      _
    $region19: #{tpu_custom_call.1} parent=1 // pred_check_branch
      %50 = sbr.rel (0) target = $region21
    $region20: #{tpu_custom_call.1} parent=1 // pred_region
      _
    $region21: #{tpu_custom_call.1} parent=1 // pred_fallthru
      _
    // Predicated region
    $region22: #{tpu_custom_call.1} parent=1 // pred_check
      _
    $region23: #{tpu_custom_call.1} parent=1 // pred_check_branch
      %52 = sbr.rel (0) target = $region25
    $region24: #{tpu_custom_call.1} parent=1 // pred_region
      %53 = dma.done [#allocation4], 64
    $region25: #{tpu_custom_call.1} parent=1 // pred_fallthru
      _
    // Predicated region
    $region26: #{tpu_custom_call.1} parent=1 // pred_check
      _
    $region27: #{tpu_custom_call.1} parent=1 // pred_check_branch
      %55 = sbr.rel (0) target = $region29
    $region28: #{tpu_custom_call.1} parent=1 // pred_region
      %56 = dma.done [#allocation7], 1024
    $region29: #{tpu_custom_call.1} parent=1 // pred_fallthru
      _
    // Predicated region
    $region30: #{tpu_custom_call.1} parent=1 // pred_check
      _
    $region31: #{tpu_custom_call.1} parent=1 // pred_check_branch
      %58 = sbr.rel (0) target = $region33
    $region32: #{tpu_custom_call.1} parent=1 // pred_region
      %59 = dma.done [#allocation7], 1024
    $region33: #{tpu_custom_call.1} parent=1 // pred_fallthru
      _
    %p61 = scmp.eq.s32.totalorder 0, 0
    // Predicated region
    $region34: #{tpu_custom_call.1} parent=1 // pred_check
      %p62 = pneg %p61
    $region35: #{tpu_custom_call.1} parent=1 // pred_check_branch
      %64 = sbr.rel (%p62) target = $region37
    $region36: #{tpu_custom_call.1} parent=1 // pred_region
      %v65 = vld [vmem:[#allocation3] sm:$0xf]
      %v66 = vld [vmem:[#allocation6] sm:$0xf]
      %v67 = vld [vmem:[#allocation6 + $0x4] sm:$0xf]
      %v68 = vld [vmem:[#allocation6 + $0x8] sm:$0xf]
      %v69 = vld [vmem:[#allocation6 + $0xc] sm:$0xf]
      %v70 = vld [vmem:[#allocation6 + $0x10] sm:$0xf]
      %v71 = vld [vmem:[#allocation6 + $0x14] sm:$0xf]
      %v72 = vld [vmem:[#allocation6 + $0x18] sm:$0xf]
      %v73 = vld [vmem:[#allocation6 + $0x1c] sm:$0xf]
      %v74 = vld [vmem:[#allocation6 + $0x20] sm:$0xf]
      %v75 = vld [vmem:[#allocation6 + $0x24] sm:$0xf]
      %v76 = vld [vmem:[#allocation6 + $0x28] sm:$0xf]
      %v77 = vld [vmem:[#allocation6 + $0x2c] sm:$0xf]
      %v78 = vld [vmem:[#allocation6 + $0x30] sm:$0xf]
      %v79 = vld [vmem:[#allocation6 + $0x34] sm:$0xf]
      %v80 = vld [vmem:[#allocation6 + $0x38] sm:$0xf]
      %v81 = vld [vmem:[#allocation6 + $0x3c] sm:$0xf]
      %v82 = vld [vmem:[%s2] sm:$0x1]
      %v84 = vlaneseq
      %v85 = vshrl.u32 %v84, 7
      %v86 = vsub.s32 0, %v85
      %v87 = vrot.slane %v82, %v86
      %v105 = vunpack.c.l.b16 %v66
      %v106 = vunpack.c.l.b16 %v67
      %v107 = vunpack.c.l.b16 %v68
      %v108 = vunpack.c.l.b16 %v69
      %v109 = vunpack.c.l.b16 %v70
      %v110 = vunpack.c.l.b16 %v71
      %v111 = vunpack.c.l.b16 %v72
      %v112 = vunpack.c.l.b16 %v73
      %v113 = vunpack.c.l.b16 %v74
      %v114 = vunpack.c.l.b16 %v75
      %v115 = vunpack.c.l.b16 %v76
      %v116 = vunpack.c.l.b16 %v77
      %v117 = vunpack.c.l.b16 %v78
      %v118 = vunpack.c.l.b16 %v79
      %v119 = vunpack.c.l.b16 %v80
      %v120 = vunpack.c.l.b16 %v81
      %v121 = vpack.c.b16 %v106, %v105
      %v122 = vpack.c.b16 %v108, %v107
      %v123 = vpack.c.b16 %v110, %v109
      %v124 = vpack.c.b16 %v112, %v111
      %v125 = vpack.c.b16 %v114, %v113
      %v126 = vpack.c.b16 %v116, %v115
      %v127 = vpack.c.b16 %v118, %v117
      %v128 = vpack.c.b16 %v120, %v119
      %137 = vmatprep.subr.bf16.mxu0 0
      %138 = vmatpush1.bf16.msra.mxu0 %v128
      %139 = vmatprep.subr.bf16.mxu0 0
      %140 = vmatpush1.bf16.msra.mxu0 %v127
      %141 = vmatprep.subr.bf16.mxu0 0
      %142 = vmatpush1.bf16.msra.mxu0 %v126
      %143 = vmatprep.subr.bf16.mxu0 0
      %144 = vmatpush1.bf16.msra.mxu0 %v125
      %145 = vmatprep.subr.bf16.mxu0 0
      %146 = vmatpush1.bf16.msra.mxu0 %v124
      %147 = vmatprep.subr.bf16.mxu0 0
      %148 = vmatpush1.bf16.msra.mxu0 %v123
      %149 = vmatprep.subr.bf16.mxu0 0
      %150 = vmatpush1.bf16.msra.mxu0 %v122
      %151 = vmatprep.subr.bf16.mxu0 0
      %152 = vmatpush1.bf16.msra.mxu0 %v121
      %153 = vmatprep.subr.bf16.mxu0 0
      %154 = vmatpush2.bf16.msra.mxu0 0
      %155 = vmatprep.subr.bf16.mxu0 0
      %156 = vmatpush2.bf16.msra.mxu0 0
      %157 = vmatprep.subr.bf16.mxu0 0
      %158 = vmatpush2.bf16.msra.mxu0 0
      %159 = vmatprep.subr.bf16.mxu0 0
      %160 = vmatpush2.bf16.msra.mxu0 0
      %161 = vmatprep.subr.bf16.mxu0 0
      %162 = vmatpush2.bf16.msra.mxu0 0
      %163 = vmatprep.subr.bf16.mxu0 0
      %164 = vmatpush2.bf16.msra.mxu0 0
      %165 = vmatprep.subr.bf16.mxu0 0
      %166 = vmatpush2.bf16.msra.mxu0 0
      %167 = vmatprep.subr.bf16.mxu0 0
      %168 = vmatpush2.bf16.msra.mxu0 0
      %169 = vmatprep.mubr.bf16.mxu0 0
      %170 = vmatmul.mubr.bf16.gmra.mxu0 %v65
      %v171 = vpop.f32.mrf.mxu0
      %v172 = vadd.f32 %v87, %v171
      %v173 = vpop.f32.mrf.mxu0
      %v174 = vpop.f32.mrf.mxu0
      %v175 = vpop.f32.mrf.mxu0
      %176 = vdwg.mxu0
      %v177 = vmax.f32 %v172, 0.0
      %v178 = vpack.c.bf16 %v177, %v177
      %179 = vst [vmem:[#allocation2] sm:$0xf] %v178
    $region37: #{tpu_custom_call.1} parent=1 // pred_fallthru
      _
    %v180 = vld [vmem:[#allocation2] sm:$0xf]
    %v181 = vld [vmem:[#allocation8] sm:$0xf]
    %v182 = vld [vmem:[#allocation8 + $0x4] sm:$0xf]
    %v183 = vld [vmem:[#allocation8 + $0x8] sm:$0xf]
    %v184 = vld [vmem:[#allocation8 + $0xc] sm:$0xf]
    %v185 = vld [vmem:[#allocation8 + $0x10] sm:$0xf]
    %v186 = vld [vmem:[#allocation8 + $0x14] sm:$0xf]
    %v187 = vld [vmem:[#allocation8 + $0x18] sm:$0xf]
    %v188 = vld [vmem:[#allocation8 + $0x1c] sm:$0xf]
    %v189 = vld [vmem:[#allocation8 + $0x20] sm:$0xf]
    %v190 = vld [vmem:[#allocation8 + $0x24] sm:$0xf]
    %v191 = vld [vmem:[#allocation8 + $0x28] sm:$0xf]
    %v192 = vld [vmem:[#allocation8 + $0x2c] sm:$0xf]
    %v193 = vld [vmem:[#allocation8 + $0x30] sm:$0xf]
    %v194 = vld [vmem:[#allocation8 + $0x34] sm:$0xf]
    %v195 = vld [vmem:[#allocation8 + $0x38] sm:$0xf]
    %v196 = vld [vmem:[#allocation8 + $0x3c] sm:$0xf]
    %v197 = vld [vmem:[%s4] sm:$0x1]
    %v199 = vlaneseq
    %v200 = vshrl.u32 %v199, 7
    %v201 = vsub.s32 0, %v200
    %v202 = vrot.slane %v197, %v201
    %v220 = vunpack.c.l.b16 %v181
    %v221 = vunpack.c.l.b16 %v182
    %v222 = vunpack.c.l.b16 %v183
    %v223 = vunpack.c.l.b16 %v184
    %v224 = vunpack.c.l.b16 %v185
    %v225 = vunpack.c.l.b16 %v186
    %v226 = vunpack.c.l.b16 %v187
    %v227 = vunpack.c.l.b16 %v188
    %v228 = vunpack.c.l.b16 %v189
    %v229 = vunpack.c.l.b16 %v190
    %v230 = vunpack.c.l.b16 %v191
    %v231 = vunpack.c.l.b16 %v192
    %v232 = vunpack.c.l.b16 %v193
    %v233 = vunpack.c.l.b16 %v194
    %v234 = vunpack.c.l.b16 %v195
    %v235 = vunpack.c.l.b16 %v196
    %v236 = vpack.c.b16 %v221, %v220
    %v237 = vpack.c.b16 %v223, %v222
    %v238 = vpack.c.b16 %v225, %v224
    %v239 = vpack.c.b16 %v227, %v226
    %v240 = vpack.c.b16 %v229, %v228
    %v241 = vpack.c.b16 %v231, %v230
    %v242 = vpack.c.b16 %v233, %v232
    %v243 = vpack.c.b16 %v235, %v234
    %252 = vmatprep.subr.bf16.mxu0 0
    %253 = vmatpush1.bf16.msra.mxu0 %v243
    %254 = vmatprep.subr.bf16.mxu0 0
    %255 = vmatpush1.bf16.msra.mxu0 %v242
    %256 = vmatprep.subr.bf16.mxu0 0
    %257 = vmatpush1.bf16.msra.mxu0 %v241
    %258 = vmatprep.subr.bf16.mxu0 0
    %259 = vmatpush1.bf16.msra.mxu0 %v240
    %260 = vmatprep.subr.bf16.mxu0 0
    %261 = vmatpush1.bf16.msra.mxu0 %v239
    %262 = vmatprep.subr.bf16.mxu0 0
    %263 = vmatpush1.bf16.msra.mxu0 %v238
    %264 = vmatprep.subr.bf16.mxu0 0
    %265 = vmatpush1.bf16.msra.mxu0 %v237
    %266 = vmatprep.subr.bf16.mxu0 0
    %267 = vmatpush1.bf16.msra.mxu0 %v236
    %268 = vmatprep.subr.bf16.mxu0 0
    %269 = vmatpush2.bf16.msra.mxu0 0
    %270 = vmatprep.subr.bf16.mxu0 0
    %271 = vmatpush2.bf16.msra.mxu0 0
    %272 = vmatprep.subr.bf16.mxu0 0
    %273 = vmatpush2.bf16.msra.mxu0 0
    %274 = vmatprep.subr.bf16.mxu0 0
    %275 = vmatpush2.bf16.msra.mxu0 0
    %276 = vmatprep.subr.bf16.mxu0 0
    %277 = vmatpush2.bf16.msra.mxu0 0
    %278 = vmatprep.subr.bf16.mxu0 0
    %279 = vmatpush2.bf16.msra.mxu0 0
    %280 = vmatprep.subr.bf16.mxu0 0
    %281 = vmatpush2.bf16.msra.mxu0 0
    %282 = vmatprep.subr.bf16.mxu0 0
    %283 = vmatpush2.bf16.msra.mxu0 0
    %284 = vmatprep.mubr.bf16.mxu0 0
    %285 = vmatmul.mubr.bf16.gmra.mxu0 %v180
    %v286 = vpop.f32.mrf.mxu0
    %v287 = vadd.f32 %v202, %v286
    %v288 = vpop.f32.mrf.mxu0
    %v289 = vpop.f32.mrf.mxu0
    %v290 = vpop.f32.mrf.mxu0
    %291 = vdwg.mxu0
    %292 = vst [vmem:[#allocation9] sm:$0xff] %v287
    // Predicated region
    $region38: #{tpu_custom_call.1} parent=1 // pred_check
      _
    $region39: #{tpu_custom_call.1} parent=1 // pred_check_branch
      %294 = sbr.rel (0) target = $region41
    $region40: #{tpu_custom_call.1} parent=1 // pred_region
      %s296 = ssub.s32 128, 128
      %297 = vsyncadd [#allocation5], %s296
      %s299 = sshll.u32 [#allocation9], 4
      %s300 = int_to_ptr.vmem [resolvable:$true] %s299
      %302 = dma.vmem_to_hbm [thread:$0]  %s300, 128, %s5, [#allocation5]
    $region41: #{tpu_custom_call.1} parent=1 // pred_fallthru
      _
    // Predicated region
    $region42: #{tpu_custom_call.1} parent=1 // pred_check
      _
    $region43: #{tpu_custom_call.1} parent=1 // pred_check_branch
      %304 = sbr.rel (0) target = $region45
    $region44: #{tpu_custom_call.1} parent=1 // pred_region
      %305 = dma.done [#allocation5], 128
    $region45: #{tpu_custom_call.1} parent=1 // pred_fallthru
      _
    %306 = vsyncpa [#allocation4], 1
    %307 = vsyncpa [#allocation7], 1
    %308 = vsyncpa [#allocation5], 1

</llo_original>
